<compile_context>
chip_gen: v5e
topology: v5e:2x2
jax: 0.10.0
libtpu: 0.0.40
codegen_flags: <defaults>
</compile_context>

<pallas_src>
import functools

import jax
import jax.numpy as jnp
from jax.experimental import pallas as pl
from jax.experimental.pallas import tpu as pltpu


def _round_up(x, m):
    return ((x + m - 1) // m) * m


def _vmem_capacity_bytes():
    """Physical VMEM of the local chip; conservative fallback if unknown."""
    try:
        info = pltpu.get_tpu_info()
        for attr in ("vmem_capacity_bytes", "vmem_bytes", "vmem_size_bytes"):
            v = getattr(info, attr, None)
            if v:
                return int(v)
    except Exception:
        pass
    return 64 << 20  # v7x-sized (smallest current gen) => always safe


def _ffn_kernel(x_ref, w1_ref, b1_ref, w2_ref, b2_ref, o_ref, acc_ref, *,
                use_gelu, act_dtype):
    # x_ref:  (tm, E)     w1_ref: (E, th)   b1_ref: (1, th)  f32
    # w2_ref: (th, E)     b2_ref: (1, E)    f32    o_ref: (tm, E)
    # acc_ref: (tm, E) f32 scratch, resident across the H-reduction axis.
    k = pl.program_id(1)

    @pl.when(k == 0)
    def _init():
        # Fold the output bias into the accumulator init (drops the +b2 VPU
        # pass from the epilogue).
        acc_ref[...] = jnp.broadcast_to(b2_ref[...], acc_ref.shape)

    # First matmul chunk on the MXU with f32 accumulation, then bias.
    h = jnp.dot(x_ref[...], w1_ref[...],
                preferred_element_type=jnp.float32) + b1_ref[...]

    # Optional narrow elementwise path (bf16 VALU/EUP on v6e/v7x).
    if act_dtype is not None:
        h = h.astype(act_dtype)

    if use_gelu:
        # GELU(approximate='tanh') — elementwise, exact per H-chunk.
        c = 0.7978845608028654  # sqrt(2/pi)
        h = 0.5 * h * (1.0 + jnp.tanh(c * (h + 0.044715 * h * h * h)))
    else:
        h = jnp.maximum(h, 0.0)

    # Second matmul chunk, accumulated into the resident f32 accumulator.
    acc_ref[...] += jnp.dot(h.astype(w2_ref.dtype), w2_ref[...],
                            preferred_element_type=jnp.float32)

    @pl.when(k == pl.num_programs(1) - 1)
    def _finalize():
        o_ref[...] = acc_ref[...].astype(o_ref.dtype)


def feed_forward(x, w1, b1, w2, b2, *, use_gelu=False, compute_dtype=None,
                 act_dtype=None, tm=512, th=None, weight_buffers=2):
    """x: (B, S, E). w1: (E, 4E), b1: (4E,), w2: (4E, E), b2: (E,).

    compute_dtype=jnp.bfloat16 casts x/W1/W2 once in the wrapper (recommended
    on v6e/v7x); accumulation stays f32, biases stay f32. act_dtype=bf16
    additionally narrows the bias+activation math (v6e/v7x only).
    """
    B, S, E = x.shape
    H = w1.shape[1]
    M = B * S
    out_dtype = x.dtype

    x2d = x.reshape(M, E)
    if compute_dtype is not None:
        # Cast ONCE at the pallas_call boundary — halves weight HBM bytes and
        # VMEM tiles vs casting per-tile inside the kernel.
        x2d = x2d.astype(compute_dtype)
        w1 = w1.astype(compute_dtype)
        w2 = w2.astype(compute_dtype)
    b1_2d = b1.reshape(1, H).astype(jnp.float32)
    b2_2d = b2.reshape(1, E).astype(jnp.float32)

    xi = jnp.dtype(x2d.dtype).itemsize
    wi = jnp.dtype(w1.dtype).itemsize
    oi = jnp.dtype(out_dtype).itemsize

    # ---- Per-chip VMEM budget (128 MiB v5e/v6e, 64 MiB v7x) ----------------
    vmem_cap = _vmem_capacity_bytes()
    budget = int(vmem_cap * 0.8)          # ~102 MiB on v5e/v6e, ~51 MiB on v7x

    # ---- Row tile -----------------------------------------------------------
    # Bytes per row of tm: double-buffered x and out tiles + the f32 acc.
    row_cost = E * (2 * xi + 2 * oi + 4)
    tm_cap = max(8, ((budget // 2) // row_cost) // 8 * 8)
    tm_eff = _round_up(min(tm, _round_up(M, 8)), 8)
    tm_eff = max(8, min(tm_eff, tm_cap))
    # Keep >= 2 row blocks when M allows: v7x has 2 TensorCores sharing the
    # "parallel" row axis; a size-1 grid would leave one idle.
    if M > 8 and pl.cdiv(M, tm_eff) < 2:
        tm_eff = max(8, _round_up(pl.cdiv(M, 2), 8))
    n_rows = pl.cdiv(M, tm_eff)

    # ---- Hidden (reduction) tile -------------------------------------------
    w_budget = budget - tm_eff * row_cost
    full_w = weight_buffers * ((E * H + H * E) * wi + (H + E) * 4)
    if full_w <= w_budget and (th is None or th >= H):
        # Whole weights are VMEM-resident: loaded once for the entire kernel
        # (constant block index), never re-streamed per row tile.
        th_eff = H
    else:
        th_cap = th if th is not None else H
        per_th = weight_buffers * (2 * E * wi + 4)       # W1 col + W2 row + b1
        fits_th = max(0, (w_budget - weight_buffers * E * 4) // max(per_th, 1))
        cand = None
        d = 128
        while d <= H:                                     # 128-multiple divisors
            if H % d == 0 and d <= th_cap and d <= fits_th:
                cand = d
            d += 128
        if cand is None:
            d = 128                                       # smallest that exists
            while d <= H and cand is None:
                if H % d == 0:
                    cand = d
                d += 128
        th_eff = cand if cand is not None else H          # e.g. H < 128
    nk = H // th_eff

    # ---- VMEM limit: sized to the tiles, headroom under the physical cap ---
    est_vmem = (2 * tm_eff * E * (xi + oi)
                + tm_eff * E * 4
                + weight_buffers * (E * th_eff + th_eff * E) * wi
                + weight_buffers * (th_eff + E) * 4)
    hard_cap = vmem_cap - (8 << 20)
    vmem_limit = int(min(max(est_vmem + (4 << 20), 32 << 20), hard_cap))

    # ---- Honest cost estimate (includes weight re-stream factor) -----------
    weight_stream = 1 if nk == 1 else n_rows
    cost = pl.CostEstimate(
        flops=2 * 2 * M * E * H,
        transcendentals=(M * H) if use_gelu else 0,
        bytes_accessed=int(xi * M * E + oi * M * E
                           + weight_stream * wi * 2 * E * H
                           + weight_stream * 4 * H + 4 * E),
    )

    kernel = functools.partial(_ffn_kernel, use_gelu=use_gelu,
                               act_dtype=act_dtype)

    wspec_kwargs = {}
    if weight_buffers != 2:
        wspec_kwargs["pipeline_mode"] = pl.Buffered(weight_buffers)
    w1_spec = pl.BlockSpec((E, th_eff), lambda i, k: (0, k), **wspec_kwargs)
    w2_spec = pl.BlockSpec((th_eff, E), lambda i, k: (k, 0), **wspec_kwargs)

    out2d = pl.pallas_call(
        kernel,
        out_shape=jax.ShapeDtypeStruct((M, E), out_dtype),
        grid_spec=pltpu.PrefetchScalarGridSpec(
            num_scalar_prefetch=0,
            grid=(n_rows, nk),
            in_specs=[
                pl.BlockSpec((tm_eff, E), lambda i, k: (i, 0)),   # x row tile
                w1_spec,                                          # W1 H-chunk
                pl.BlockSpec((1, th_eff), lambda i, k: (0, k)),   # b1 H-chunk
                w2_spec,                                          # W2 H-chunk
                pl.BlockSpec((1, E), lambda i, k: (0, 0)),        # b2
            ],
            out_specs=pl.BlockSpec((tm_eff, E), lambda i, k: (i, 0)),
            scratch_shapes=[pltpu.VMEM((tm_eff, E), jnp.float32)],
        ),
        compiler_params=pltpu.CompilerParams(
            dimension_semantics=("parallel", "arbitrary"),
            vmem_limit_bytes=vmem_limit,
        ),
        cost_estimate=cost,
    )(x2d, w1, b1_2d, w2, b2_2d)

    return out2d.reshape(B, S, E)


def _reference(x, w1, b1, w2, b2, use_gelu=False):
    h = x @ w1 + b1
    if use_gelu:
        c = 0.7978845608028654
        h = 0.5 * h * (1.0 + jnp.tanh(c * (h + 0.044715 * h ** 3)))
    else:
        h = jnp.maximum(h, 0.0)
    return h @ w2 + b2


if __name__ == "__main__":
    # Small shapes consistent with the module: batch=2, seq=8, embedding=32.
    B, S, E = 2, 8, 32
    H = 4 * E  # 128

    key = jax.random.PRNGKey(0)
    kx, k1, k2, k3, k4 = jax.random.split(key, 5)

    x = jax.random.normal(kx, (B, S, E), dtype=jnp.float32)
    # nn.Linear-shaped params, stored pre-transposed as (in, out).
    bound1 = 1.0 / (E ** 0.5)
    bound2 = 1.0 / (H ** 0.5)
    w1 = jax.random.uniform(k1, (E, H), minval=-bound1, maxval=bound1, dtype=jnp.float32)
    b1 = jax.random.uniform(k2, (H,), minval=-bound1, maxval=bound1, dtype=jnp.float32)
    w2 = jax.random.uniform(k3, (H, E), minval=-bound2, maxval=bound2, dtype=jnp.float32)
    b2 = jax.random.uniform(k4, (E,), minval=-bound2, maxval=bound2, dtype=jnp.float32)

    # ReLU path (module default), full f32 — tight check vs the reference.
    out = feed_forward(x, w1, b1, w2, b2, use_gelu=False)
    out = jax.block_until_ready(out)
    ref = _reference(x, w1, b1, w2, b2, use_gelu=False)
    assert out.shape == (B, S, E)
    assert jnp.allclose(out, ref, atol=1e-5, rtol=1e-5), "ReLU path mismatch"

    # GELU(tanh) path, f32.
    out_g = feed_forward(x, w1, b1, w2, b2, use_gelu=True)
    out_g = jax.block_until_ready(out_g)
    ref_g = _reference(x, w1, b1, w2, b2, use_gelu=True)
    assert jnp.allclose(out_g, ref_g, atol=1e-5, rtol=1e-5), "GELU path mismatch"

    # bf16 production path (weights/x cast once in the wrapper, f32 accumulate)
    # — looser tolerance is expected bf16 error, not a kernel bug.
    out_b = feed_forward(x, w1, b1, w2, b2, use_gelu=True,
                         compute_dtype=jnp.bfloat16)
    out_b = jax.block_until_ready(out_b)
    assert out_b.dtype == x.dtype
    assert jnp.allclose(out_b, ref_g, atol=5e-2, rtol=5e-2), "bf16 path mismatch"

    print("KERNEL_OK")
</pallas_src>

<mosaic_0001>
module attributes {stable_mosaic.version = 11 : i64} {
  func.func @_ffn_kernel(%arg0: i32, %arg1: i32, %arg2: memref<8x32xf32, #tpu.memory_space<vmem>>, %arg3: memref<32x128xf32, #tpu.memory_space<vmem>>, %arg4: memref<1x128xf32, #tpu.memory_space<vmem>>, %arg5: memref<128x32xf32, #tpu.memory_space<vmem>>, %arg6: memref<1x32xf32, #tpu.memory_space<vmem>>, %arg7: memref<8x32xf32, #tpu.memory_space<vmem>>, %arg8: memref<8x32xf32, #tpu.memory_space<vmem>>) attributes {dimension_semantics = [#tpu.dimension_semantics<parallel>, #tpu.dimension_semantics<arbitrary>], iteration_bounds = array<i64: 2, 1>, scalar_prefetch = 0 : i64, scratch_operands = 1 : i64, tpu.core_type = #tpu.core_type<tc>, window_params = [{transform_indices = @transform_0, window_bounds = array<i64: 8, 32>}, {transform_indices = @transform_1, window_bounds = array<i64: 32, 128>}, {transform_indices = @transform_2, window_bounds = array<i64: 1, 128>}, {transform_indices = @transform_3, window_bounds = array<i64: 128, 32>}, {pipeline_mode = #tpu.pipeline_mode<synchronous>, transform_indices = @transform_4, window_bounds = array<i64: 1, 32>}, {transform_indices = @transform_5, window_bounds = array<i64: 8, 32>}]} {
    %c0_i32 = arith.constant 0 : i32
    %0 = arith.cmpi eq, %arg1, %c0_i32 : i32
    %1 = arith.extui %0 : i1 to i32
    %c0_i32_0 = arith.constant 0 : i32
    %2 = arith.cmpi ne, %1, %c0_i32_0 : i32
    scf.if %2 {
      %c0_16 = arith.constant 0 : index
      %c0_17 = arith.constant 0 : index
      %19 = vector.load %arg6[%c0_16, %c0_17] : memref<1x32xf32, #tpu.memory_space<vmem>>, vector<1x32xf32>
      %20 = vector.shape_cast %19 : vector<1x32xf32> to vector<1x32xf32>
      %21 = vector.broadcast %20 : vector<1x32xf32> to vector<8x32xf32>
      %c0_18 = arith.constant 0 : index
      %c0_19 = arith.constant 0 : index
      %22 = vector.load %arg8[%c0_18, %c0_19] : memref<8x32xf32, #tpu.memory_space<vmem>>, vector<8x32xf32>
      tpu.vector_store %arg8[%c0_18, %c0_19], %21 {strides = array<i32>} : memref<8x32xf32, #tpu.memory_space<vmem>>, vector<8x32xf32>,
    } else {
    }
    %c0 = arith.constant 0 : index
    %c0_1 = arith.constant 0 : index
    %3 = vector.load %arg2[%c0, %c0_1] : memref<8x32xf32, #tpu.memory_space<vmem>>, vector<8x32xf32>
    %c0_2 = arith.constant 0 : index
    %c0_3 = arith.constant 0 : index
    %4 = vector.load %arg3[%c0_2, %c0_3] : memref<32x128xf32, #tpu.memory_space<vmem>>, vector<32x128xf32>
    %cst = arith.constant dense<0.000000e+00> : vector<8x128xf32>
    %5 = tpu.matmul %3, %4, %cst {dimension_numbers = #tpu.dot_dimension_numbers<[1], [0], [0], [1], [0, 0, 1, 1], [], []>} : vector<8x32xf32>, vector<32x128xf32>, vector<8x128xf32> -> vector<8x128xf32>
    %c0_4 = arith.constant 0 : index
    %c0_5 = arith.constant 0 : index
    %6 = vector.load %arg4[%c0_4, %c0_5] : memref<1x128xf32, #tpu.memory_space<vmem>>, vector<1x128xf32>
    %7 = vector.broadcast %6 : vector<1x128xf32> to vector<8x128xf32>
    %8 = arith.addf %5, %7 : vector<8x128xf32>
    %cst_6 = arith.constant 0.000000e+00 : f32
    %9 = vector.broadcast %cst_6 : f32 to vector<8x128xf32>
    %10 = arith.maximumf %8, %9 : vector<8x128xf32>
    %c0_7 = arith.constant 0 : index
    %c0_8 = arith.constant 0 : index
    %11 = vector.load %arg8[%c0_7, %c0_8] : memref<8x32xf32, #tpu.memory_space<vmem>>, vector<8x32xf32>
    %c0_9 = arith.constant 0 : index
    %c0_10 = arith.constant 0 : index
    %12 = vector.load %arg5[%c0_9, %c0_10] : memref<128x32xf32, #tpu.memory_space<vmem>>, vector<128x32xf32>
    %cst_11 = arith.constant dense<0.000000e+00> : vector<8x32xf32>
    %13 = tpu.matmul %10, %12, %cst_11 {dimension_numbers = #tpu.dot_dimension_numbers<[1], [0], [0], [1], [0, 0, 1, 1], [], []>} : vector<8x128xf32>, vector<128x32xf32>, vector<8x32xf32> -> vector<8x32xf32>
    %14 = arith.addf %11, %13 : vector<8x32xf32>
    %c0_12 = arith.constant 0 : index
    %c0_13 = arith.constant 0 : index
    %15 = vector.load %arg8[%c0_12, %c0_13] : memref<8x32xf32, #tpu.memory_space<vmem>>, vector<8x32xf32>
    tpu.vector_store %arg8[%c0_12, %c0_13], %14 {strides = array<i32>} : memref<8x32xf32, #tpu.memory_space<vmem>>, vector<8x32xf32>,
    %c0_i32_14 = arith.constant 0 : i32
    %16 = arith.cmpi eq, %arg1, %c0_i32_14 : i32
    %17 = arith.extui %16 : i1 to i32
    %c0_i32_15 = arith.constant 0 : i32
    %18 = arith.cmpi ne, %17, %c0_i32_15 : i32
    scf.if %18 {
      %c0_16 = arith.constant 0 : index
      %c0_17 = arith.constant 0 : index
      %19 = vector.load %arg8[%c0_16, %c0_17] : memref<8x32xf32, #tpu.memory_space<vmem>>, vector<8x32xf32>
      %c0_18 = arith.constant 0 : index
      %c0_19 = arith.constant 0 : index
      %20 = vector.load %arg7[%c0_18, %c0_19] : memref<8x32xf32, #tpu.memory_space<vmem>>, vector<8x32xf32>
      tpu.vector_store %arg7[%c0_18, %c0_19], %19 {strides = array<i32>} : memref<8x32xf32, #tpu.memory_space<vmem>>, vector<8x32xf32>,
    } else {
    }
    return
  }
  func.func @transform_0(%arg0: i32, %arg1: i32) -> (i32, i32) {
    %c0_i32 = arith.constant 0 : i32
    %c0_i32_0 = arith.constant 0 : i32
    return %arg0, %c0_i32 : i32, i32
  }
  func.func @transform_1(%arg0: i32, %arg1: i32) -> (i32, i32) {
    %c0_i32 = arith.constant 0 : i32
    %c0_i32_0 = arith.constant 0 : i32
    return %c0_i32, %arg1 : i32, i32
  }
  func.func @transform_2(%arg0: i32, %arg1: i32) -> (i32, i32) {
    %c0_i32 = arith.constant 0 : i32
    %c0_i32_0 = arith.constant 0 : i32
    return %c0_i32, %arg1 : i32, i32
  }
  func.func @transform_3(%arg0: i32, %arg1: i32) -> (i32, i32) {
    %c0_i32 = arith.constant 0 : i32
    %c0_i32_0 = arith.constant 0 : i32
    return %arg1, %c0_i32 : i32, i32
  }
  func.func @transform_4(%arg0: i32, %arg1: i32) -> (i32, i32) {
    %c0_i32 = arith.constant 0 : i32
    %c0_i32_0 = arith.constant 0 : i32
    %c0_i32_1 = arith.constant 0 : i32
    return %c0_i32, %c0_i32_0 : i32, i32
  }
  func.func @transform_5(%arg0: i32, %arg1: i32) -> (i32, i32) {
    %c0_i32 = arith.constant 0 : i32
    %c0_i32_0 = arith.constant 0 : i32
    return %arg0, %c0_i32 : i32, i32
  }
}

</mosaic_0001>

<llo_original>
// kernel: tpu_custom_call.1
$region0: #{tpu_custom_call.1}
  #allocation0 [shape = 'u32[]', space=smem, size = 0x4, offset = 0x4, fixed_abs, tag = 'smem constant byte address 0x4 - core index']
  #allocation1 [shape = 'u32[72,128]{1,0:T(1,128)}', space=vmem, size = 0x9000, scoped, tag = 'internal scratch']
  #allocation2 [shape = 'f32[8,32]{1,0:T(8,128)}', space=vmem, size = 0x1000, scoped, tag = 'scratch operand']
  %s0 = inlined_call_operand.vmem [shape: f32[16,32], index: 0, kind: input, shape index: {}]
  %s1 = inlined_call_operand.vmem [shape: f32[32,128], index: 1, kind: input, shape index: {}]
  %s2 = inlined_call_operand.vmem [shape: f32[1,128], index: 2, kind: input, shape index: {}]
  %s3 = inlined_call_operand.vmem [shape: f32[128,32], index: 3, kind: input, shape index: {}]
  %s4 = inlined_call_operand.vmem [shape: f32[1,32], index: 4, kind: input, shape index: {}]
  %s5 = inlined_call_operand.hbm [shape: f32[16,32], index: 5, kind: output, shape index: {}]
  %s6 = sld [smem:[#allocation0]]
  $region61: #{tpu_custom_call.1} parent=0
    _
  %s8 = ssub.s32 1, %s6
  %s9 = scalar_select 0, %s8, %s6
  $region1: #{tpu_custom_call.1} parent=0
    #allocation3 [shape = 'u8[8192]{0}', space=vmem, size = 0x2000, scoped, tag = 'output window, operand 0']
    #allocation4 [shape = 's32[2]{0}', space=sflag, size = 0x8, scoped, tag = 'scoped memory for tpu_custom_call.1']
    %10 = vsyncpa [#allocation4], 0
    %s11 = scalar_lea.sflag [#allocation4], 1
    %12 = vsyncpa %s11, 0
    loop: start=0, step=1, limit=4
    $region2: #{tpu_custom_call.1} parent=1 // loop_pre_header
      _
    $region3: #{tpu_custom_call.1} parent=1 // loop_header
      %s14 = sphi 0, %s18
      %p15 = scmp.ge.s32.totalorder %s14, 4
      %s21 = sphi 0, %s33
      %s22 = sphi 0, %s29
      %s23 = sphi 0, %s21
      %s24 = sphi 0, %s22
      %s25 = sphi 0, %s23
      %s26 = sphi 0, %s24
      %s36 = sphi 0, %s38
      %s39 = sphi 0, %s36
      %s40 = sphi 0, %s39
      %s56 = sphi 0, %s40
      %s62 = sphi 0, %s64
      %s65 = sphi 0, %s62
      %s66 = sphi 0, %s65
      %s82 = sphi 0, %s66
      %s88 = sphi 0, %s90
      %s91 = sphi 0, %s88
      %s92 = sphi 0, %s91
      %s108 = sphi 0, %s92
      %s114 = sphi 0, %s116
      %s117 = sphi 0, %s114
      %s118 = sphi 0, %s117
      %s134 = sphi 0, %s118
      %s138 = sphi 0, %s138
      %s140 = sphi 0, %s138
      %s141 = sphi 0, %s140
      %s155 = sphi 0, %s141
      %s161 = sphi 0, %s163
      %s164 = sphi 0, %s161
      %s165 = sphi 0, %s164
      %s181 = sphi 0, %s165
    $region4: #{tpu_custom_call.1} parent=1 // loop_header_branch
      %17 = sbr.rel (%p15) target = $region8
    $region5: #{tpu_custom_call.1} parent=1 // loop_body
      %s19 = ssub.s32 %s14, 1
      %s20 = ssub.s32 %s14, 2
      %s27 = sadd.s32 1, %s22
      %p28 = scmp.ge.s32.totalorder %s27, 1
      %s29 = scalar_select %p28, 0, %s27
      %s30 = sadd.s32 1, %s21
      %s31 = scalar_select %p28, %s30, %s21
      %p32 = scmp.ge.s32.totalorder %s31, 2
      %s33 = scalar_select %p32, 0, %s31
      %s34 = ssub.s32 %s21, %s33
      %p35 = scmp.eq.s32.totalorder %s34, 0
      %s37 = sadd.s32 %s36, 1
      %s38 = scalar_select %p35, %s36, %s37
      %p41 = pneg %p35
      %p42 = scmp.eq.s32.totalorder %s14, 1
      %p43 = por %p41, %p42
      %p44 = scmp.ne.s32.totalorder %s36, %s39
      %p45 = scmp.eq.s32.totalorder %s14, 0
      %p46 = por %p44, %p45
      %p47 = scmp.ne.s32.totalorder %s36, %s39
      %p48 = scmp.eq.s32.totalorder %s19, 1
      %p49 = por %p47, %p48
      %p50 = scmp.ne.s32.totalorder %s39, %s40
      %p51 = scmp.eq.s32.totalorder %s19, 0
      %p52 = por %p50, %p51
      %p53 = scmp.ne.s32.totalorder %s39, %s40
      %p54 = scmp.eq.s32.totalorder %s20, 1
      %p55 = por %p53, %p54
      %p57 = scmp.ne.s32.totalorder %s40, %s56
      %p58 = scmp.eq.s32.totalorder %s20, 0
      %p59 = por %p57, %p58
      %s60 = ssub.s32 %s22, %s29
      %p61 = scmp.eq.s32.totalorder %s60, 0
      %s63 = sadd.s32 %s62, 1
      %s64 = scalar_select %p61, %s62, %s63
      %p67 = pneg %p61
      %p68 = scmp.eq.s32.totalorder %s14, 1
      %p69 = por %p67, %p68
      %p70 = scmp.ne.s32.totalorder %s62, %s65
      %p71 = scmp.eq.s32.totalorder %s14, 0
      %p72 = por %p70, %p71
      %p73 = scmp.ne.s32.totalorder %s62, %s65
      %p74 = scmp.eq.s32.totalorder %s19, 1
      %p75 = por %p73, %p74
      %p76 = scmp.ne.s32.totalorder %s65, %s66
      %p77 = scmp.eq.s32.totalorder %s19, 0
      %p78 = por %p76, %p77
      %p79 = scmp.ne.s32.totalorder %s65, %s66
      %p80 = scmp.eq.s32.totalorder %s20, 1
      %p81 = por %p79, %p80
      %p83 = scmp.ne.s32.totalorder %s66, %s82
      %p84 = scmp.eq.s32.totalorder %s20, 0
      %p85 = por %p83, %p84
      %s86 = ssub.s32 %s22, %s29
      %p87 = scmp.eq.s32.totalorder %s86, 0
      %s89 = sadd.s32 %s88, 1
      %s90 = scalar_select %p87, %s88, %s89
      %p93 = pneg %p87
      %p94 = scmp.eq.s32.totalorder %s14, 1
      %p95 = por %p93, %p94
      %p96 = scmp.ne.s32.totalorder %s88, %s91
      %p97 = scmp.eq.s32.totalorder %s14, 0
      %p98 = por %p96, %p97
      %p99 = scmp.ne.s32.totalorder %s88, %s91
      %p100 = scmp.eq.s32.totalorder %s19, 1
      %p101 = por %p99, %p100
      %p102 = scmp.ne.s32.totalorder %s91, %s92
      %p103 = scmp.eq.s32.totalorder %s19, 0
      %p104 = por %p102, %p103
      %p105 = scmp.ne.s32.totalorder %s91, %s92
      %p106 = scmp.eq.s32.totalorder %s20, 1
      %p107 = por %p105, %p106
      %p109 = scmp.ne.s32.totalorder %s92, %s108
      %p110 = scmp.eq.s32.totalorder %s20, 0
      %p111 = por %p109, %p110
      %s112 = ssub.s32 %s22, %s29
      %p113 = scmp.eq.s32.totalorder %s112, 0
      %s115 = sadd.s32 %s114, 1
      %s116 = scalar_select %p113, %s114, %s115
      %p119 = pneg %p113
      %p120 = scmp.eq.s32.totalorder %s14, 1
      %p121 = por %p119, %p120
      %p122 = scmp.ne.s32.totalorder %s114, %s117
      %p123 = scmp.eq.s32.totalorder %s14, 0
      %p124 = por %p122, %p123
      %p125 = scmp.ne.s32.totalorder %s114, %s117
      %p126 = scmp.eq.s32.totalorder %s19, 1
      %p127 = por %p125, %p126
      %p128 = scmp.ne.s32.totalorder %s117, %s118
      %p129 = scmp.eq.s32.totalorder %s19, 0
      %p130 = por %p128, %p129
      %p131 = scmp.ne.s32.totalorder %s117, %s118
      %p132 = scmp.eq.s32.totalorder %s20, 1
      %p133 = por %p131, %p132
      %p135 = scmp.ne.s32.totalorder %s118, %s134
      %p136 = scmp.eq.s32.totalorder %s20, 0
      %p137 = por %p135, %p136
      %s139 = sadd.s32 %s138, 1
      %p142 = scmp.eq.s32.totalorder %s14, 1
      %p143 = scmp.ne.s32.totalorder %s138, %s140
      %p144 = scmp.eq.s32.totalorder %s14, 0
      %p145 = por %p143, %p144
      %p146 = scmp.ne.s32.totalorder %s138, %s140
      %p147 = scmp.eq.s32.totalorder %s19, 1
      %p148 = por %p146, %p147
      %p149 = scmp.ne.s32.totalorder %s140, %s141
      %p150 = scmp.eq.s32.totalorder %s19, 0
      %p151 = por %p149, %p150
      %p152 = scmp.ne.s32.totalorder %s140, %s141
      %p153 = scmp.eq.s32.totalorder %s20, 1
      %p154 = por %p152, %p153
      %p156 = scmp.ne.s32.totalorder %s141, %s155
      %p157 = scmp.eq.s32.totalorder %s20, 0
      %p158 = por %p156, %p157
      %s159 = ssub.s32 %s21, %s33
      %p160 = scmp.eq.s32.totalorder %s159, 0
      %s162 = sadd.s32 %s161, 1
      %s163 = scalar_select %p160, %s161, %s162
      %p166 = pneg %p160
      %p167 = scmp.eq.s32.totalorder %s14, 1
      %p168 = por %p166, %p167
      %p169 = scmp.ne.s32.totalorder %s161, %s164
      %p170 = scmp.eq.s32.totalorder %s14, 0
      %p171 = por %p169, %p170
      %p172 = scmp.ne.s32.totalorder %s161, %s164
      %p173 = scmp.eq.s32.totalorder %s19, 1
      %p174 = por %p172, %p173
      %p175 = scmp.ne.s32.totalorder %s164, %s165
      %p176 = scmp.eq.s32.totalorder %s19, 0
      %p177 = por %p175, %p176
      %p178 = scmp.ne.s32.totalorder %s164, %s165
      %p179 = scmp.eq.s32.totalorder %s20, 1
      %p180 = por %p178, %p179
      %p182 = scmp.ne.s32.totalorder %s165, %s181
      %p183 = scmp.eq.s32.totalorder %s20, 0
      %p184 = por %p182, %p183
      %p185 = scmp.le.s32.totalorder 1, %s14
      %p186 = scmp.lt.s32.totalorder %s14, 3
      %p187 = pnand %p185, %p186
      %p188 = pneg %p187
      // Predicated region
      $region9: #{tpu_custom_call.1} parent=5 // pred_check
        _
      $region10: #{tpu_custom_call.1} parent=5 // pred_check_branch
        %190 = sbr.rel (%p187) target = $region12
      $region11: #{tpu_custom_call.1} parent=5 // pred_region
        %s191 = ssub.s32 %s14, 1
        // Predicated region
        $region13: #{tpu_custom_call.1} parent=11 // pred_check
          %p192 = pneg %p78
        $region14: #{tpu_custom_call.1} parent=11 // pred_check_branch
          %194 = sbr.rel (%p192) target = $region16
        $region15: #{tpu_custom_call.1} parent=11 // pred_region
          %p195 = scmp.lt.s32.totalorder %s24, 0
          %s196 = scalar_select %p195, %s24, 0
          %s197 = smul.addr %s196, 8
          %s198 = scalar_lea.vmem %s1, %s197
        $region16: #{tpu_custom_call.1} parent=11 // pred_fallthru
          _
        // Predicated region
        $region17: #{tpu_custom_call.1} parent=11 // pred_check
          %p199 = pneg %p104
        $region18: #{tpu_custom_call.1} parent=11 // pred_check_branch
          %201 = sbr.rel (%p199) target = $region20
        $region19: #{tpu_custom_call.1} parent=11 // pred_region
          %p202 = scmp.lt.s32.totalorder %s24, 0
          %s203 = scalar_select %p202, %s24, 0
          %s204 = scalar_lea.vmem %s2, %s203
        $region20: #{tpu_custom_call.1} parent=11 // pred_fallthru
          _
        // Predicated region
        $region21: #{tpu_custom_call.1} parent=11 // pred_check
          %p205 = pneg %p130
        $region22: #{tpu_custom_call.1} parent=11 // pred_check_branch
          %207 = sbr.rel (%p205) target = $region24
        $region23: #{tpu_custom_call.1} parent=11 // pred_region
          %s208 = smul.u32 16, %s24
          %p209 = scmp.lt.s32.totalorder %s208, 15
          %s210 = scalar_select %p209, %s208, 15
          %s211 = smul.addr %s210, 8
          %s212 = scalar_lea.vmem %s3, %s211
          %s213 = smul.u32 16, %s24
        $region24: #{tpu_custom_call.1} parent=11 // pred_fallthru
          _
        // Predicated region
        $region25: #{tpu_custom_call.1} parent=11 // pred_check
          %p214 = pneg %p151
        $region26: #{tpu_custom_call.1} parent=11 // pred_check_branch
          %216 = sbr.rel (%p214) target = $region28
        $region27: #{tpu_custom_call.1} parent=11 // pred_region
          _
        $region28: #{tpu_custom_call.1} parent=11 // pred_fallthru
          _
      $region12: #{tpu_custom_call.1} parent=5 // pred_fallthru
        _
      %p217 = scmp.lt.s32.totalorder %s14, 2
      // Predicated region
      $region29: #{tpu_custom_call.1} parent=5 // pred_check
        %p218 = pneg %p217
      $region30: #{tpu_custom_call.1} parent=5 // pred_check_branch
        %220 = sbr.rel (%p218) target = $region32
      $region31: #{tpu_custom_call.1} parent=5 // pred_region
        // Predicated region
        $region33: #{tpu_custom_call.1} parent=31 // pred_check
          %p221 = pneg %p46
        $region34: #{tpu_custom_call.1} parent=31 // pred_check_branch
          %223 = sbr.rel (%p221) target = $region36
        $region35: #{tpu_custom_call.1} parent=31 // pred_region
          %p224 = scmp.lt.s32.totalorder %s21, 1
          %s225 = scalar_select %p224, %s21, 1
          %s226 = smul.addr %s225, 8
          %s227 = scalar_lea.vmem %s0, %s226
        $region36: #{tpu_custom_call.1} parent=31 // pred_fallthru
          _
      $region32: #{tpu_custom_call.1} parent=5 // pred_fallthru
        _
      %p228 = scmp.le.s32.totalorder 1, %s14
      %p229 = scmp.lt.s32.totalorder %s14, 3
      %p230 = pnand %p228, %p229
      %p231 = pneg %p230
      // Predicated region
      $region37: #{tpu_custom_call.1} parent=5 // pred_check
        _
      $region38: #{tpu_custom_call.1} parent=5 // pred_check_branch
        %233 = sbr.rel (%p230) target = $region40
      $region39: #{tpu_custom_call.1} parent=5 // pred_region
        %s234 = ssub.s32 %s14, 1
        %p235 = scmp.lt.s32.totalorder %s23, 1
        %s236 = scalar_select %p235, %s23, 1
        %s237 = smul.addr %s236, 8
        %s238 = scalar_lea.vmem %s0, %s237
        %p239 = pneg %p52
        %p240 = pneg %p49
        %p241 = scmp.lt.s32.totalorder %s24, 0
        %s242 = scalar_select %p241, %s24, 0
        %s243 = smul.addr %s242, 8
        %s244 = scalar_lea.vmem %s1, %s243
        %p245 = pneg %p78
        %p246 = pneg %p75
        %p247 = scmp.lt.s32.totalorder %s24, 0
        %s248 = scalar_select %p247, %s24, 0
        %s249 = scalar_lea.vmem %s2, %s248
        %p250 = pneg %p104
        %p251 = pneg %p101
        %s252 = smul.u32 16, %s24
        %p253 = scmp.lt.s32.totalorder %s252, 15
        %s254 = scalar_select %p253, %s252, 15
        %s255 = smul.addr %s254, 8
        %s256 = scalar_lea.vmem %s3, %s255
        %p257 = pneg %p130
        %p258 = pneg %p127
        %p259 = pneg %p151
        %p260 = pneg %p148
        %p261 = pneg %p177
        %p262 = pneg %p174
        %s263 = sand.u32 %s164, 1
        %s264 = scalar_lea.sflag [#allocation4], %s263
        %s265 = sand.u32 %s164, 1
        %s266 = smul.addr %s265, 8
        %s267 = scalar_lea.vmem [#allocation3], %s266
        %p268 = scmp.lt.s32.totalorder %s23, 1
        %s269 = scalar_select %p268, %s23, 1
        %s270 = smul.addr %s269, 8
        %s271 = scalar_lea.vmem %s0, %s270
        %p272 = scmp.lt.s32.totalorder %s24, 0
        %s273 = scalar_select %p272, %s24, 0
        %s274 = smul.addr %s273, 8
        %s275 = scalar_lea.vmem %s1, %s274
        %p276 = scmp.lt.s32.totalorder %s24, 0
        %s277 = scalar_select %p276, %s24, 0
        %s278 = scalar_lea.vmem %s2, %s277
        %s279 = smul.u32 16, %s24
        %p280 = scmp.lt.s32.totalorder %s279, 15
        %s281 = scalar_select %p280, %s279, 15
        %s282 = smul.addr %s281, 8
        %s283 = scalar_lea.vmem %s3, %s282
        %s284 = smul.u32 16, %s24
        %p285 = scmp.eq.s32.totalorder %s24, 0
        // Predicated region
        $region41: #{tpu_custom_call.1} parent=39 // pred_check
          %p286 = pneg %p285
        $region42: #{tpu_custom_call.1} parent=39 // pred_check_branch
          %288 = sbr.rel (%p286) target = $region44
        $region43: #{tpu_custom_call.1} parent=39 // pred_region
          %v289 = vld [vmem:[%s4] sm:$0x1]
          %v291 = vperm.slane %v289, 0
          %vm293 = vcmask 261120
          %294 = vst.msk [vmem:[#allocation2] sm:$0xff] %vm293, %v291
        $region44: #{tpu_custom_call.1} parent=39 // pred_fallthru
          _
        %v295 = vld [vmem:[%s271] sm:$0xff]
        %v296 = vld [vmem:[%s275] sm:$0xff]
        %v297 = vld [vmem:[%s275 + $0x8] sm:$0xff]
        %v298 = vld [vmem:[%s275 + $0x10] sm:$0xff]
        %v299 = vld [vmem:[%s275 + $0x18] sm:$0xff]
        %v300 = vld [vmem:[%s278] sm:$0x1]
        %v302 = vperm.slane %v300, 0
        %vm304 = vcmask 261120
        %v306 = vsel %vm304, %v295, 0
        %308 = vmatpush.msra.mxu0 0.0
        %309 = vmatpush.msra.mxu0 0.0
        %310 = vmatpush.msra.mxu0 0.0
        %311 = vmatpush.msra.mxu0 0.0
        %312 = vmatpush.msra.mxu0 0.0
        %313 = vmatpush.msra.mxu0 0.0
        %314 = vmatpush.msra.mxu0 0.0
        %315 = vmatpush.msra.mxu0 0.0
        %316 = vmatpush.msra.mxu0 0.0
        %317 = vmatpush.msra.mxu0 0.0
        %318 = vmatpush.msra.mxu0 0.0
        %319 = vmatpush.msra.mxu0 0.0
        %320 = vmatpush.msra.mxu0 %v299
        %321 = vmatpush.msra.mxu0 %v298
        %322 = vmatpush.msra.mxu0 %v297
        %323 = vmatpush.msra.mxu0 %v296
        %324 = vmatmul.f32.gmra.mxu0 %v306
        %v325 = vpop.f32.mrf.mxu0
        %v326 = vadd.f32 %v302, %v325
        %327 = vdwg.mxu0
        %v328 = vmax.f32 %v326, 0.0
        %v329 = vld [vmem:[#allocation2] sm:$0xff]
        %v330 = vld [vmem:[%s283] sm:$0xff]
        %v331 = vld [vmem:[%s283 + $0x8] sm:$0xff]
        %v332 = vld [vmem:[%s283 + $0x10] sm:$0xff]
        %v333 = vld [vmem:[%s283 + $0x18] sm:$0xff]
        %v334 = vld [vmem:[%s283 + $0x20] sm:$0xff]
        %v335 = vld [vmem:[%s283 + $0x28] sm:$0xff]
        %v336 = vld [vmem:[%s283 + $0x30] sm:$0xff]
        %v337 = vld [vmem:[%s283 + $0x38] sm:$0xff]
        %v338 = vld [vmem:[%s283 + $0x40] sm:$0xff]
        %v339 = vld [vmem:[%s283 + $0x48] sm:$0xff]
        %v340 = vld [vmem:[%s283 + $0x50] sm:$0xff]
        %v341 = vld [vmem:[%s283 + $0x58] sm:$0xff]
        %v342 = vld [vmem:[%s283 + $0x60] sm:$0xff]
        %v343 = vld [vmem:[%s283 + $0x68] sm:$0xff]
        %v344 = vld [vmem:[%s283 + $0x70] sm:$0xff]
        %v345 = vld [vmem:[%s283 + $0x78] sm:$0xff]
        %346 = vmatpush.msra.mxu0 %v345
        %347 = vmatpush.msra.mxu0 %v344
        %348 = vmatpush.msra.mxu0 %v343
        %349 = vmatpush.msra.mxu0 %v342
        %350 = vmatpush.msra.mxu0 %v341
        %351 = vmatpush.msra.mxu0 %v340
        %352 = vmatpush.msra.mxu0 %v339
        %353 = vmatpush.msra.mxu0 %v338
        %354 = vmatpush.msra.mxu0 %v337
        %355 = vmatpush.msra.mxu0 %v336
        %356 = vmatpush.msra.mxu0 %v335
        %357 = vmatpush.msra.mxu0 %v334
        %358 = vmatpush.msra.mxu0 %v333
        %359 = vmatpush.msra.mxu0 %v332
        %360 = vmatpush.msra.mxu0 %v331
        %361 = vmatpush.msra.mxu0 %v330
        %362 = vmatmul.f32.gmra.mxu0 %v328
        %v363 = vpop.f32.mrf.mxu0
        %v364 = vadd.f32 0.0, %v363
        %365 = vdwg.mxu0
        %v366 = vadd.f32 %v329, %v364
        %367 = vst.msk [vmem:[#allocation2] sm:$0xff] %vm304, %v366
        // Predicated region
        $region45: #{tpu_custom_call.1} parent=39 // pred_check
          %p368 = pneg %p285
        $region46: #{tpu_custom_call.1} parent=39 // pred_check_branch
          %370 = sbr.rel (%p368) target = $region48
        $region47: #{tpu_custom_call.1} parent=39 // pred_region
          %v371 = vld [vmem:[#allocation2] sm:$0xff]
          %372 = vst.msk [vmem:[%s267] sm:$0xff] %vm304, %v371
        $region48: #{tpu_custom_call.1} parent=39 // pred_fallthru
          _
        %s373 = sand.u32 %s164, 1
        %s374 = scalar_lea.sflag [#allocation4], %s373
        %s375 = sand.u32 %s164, 1
        %s376 = smul.addr %s375, 8
        %s377 = scalar_lea.vmem [#allocation3], %s376
        // Predicated region
        $region49: #{tpu_custom_call.1} parent=39 // pred_check
          %p378 = pneg %p174
        $region50: #{tpu_custom_call.1} parent=39 // pred_check_branch
          %380 = sbr.rel (%p378) target = $region52
        $region51: #{tpu_custom_call.1} parent=39 // pred_region
          %382 = vsyncadd %s374, 0
          %s383 = smul.addr %s23, 8
          %s384 = scalar_lea.hbm %s5, %s383
          %s386 = sshll.u32 %s377, 4
          %s387 = int_to_ptr.vmem [resolvable:$true] %s386
          %s388 = sshll.u32 %s384, 4
          %s389 = int_to_ptr.hbm [resolvable:$true] %s388
          %391 = dma.vmem_to_hbm [thread:$0]  %s387, 128, %s389, %s374
        $region52: #{tpu_custom_call.1} parent=39 // pred_fallthru
          _
      $region40: #{tpu_custom_call.1} parent=5 // pred_fallthru
        _
      %p392 = scmp.le.s32.totalorder 2, %s14
      // Predicated region
      $region53: #{tpu_custom_call.1} parent=5 // pred_check
        %p393 = pneg %p392
      $region54: #{tpu_custom_call.1} parent=5 // pred_check_branch
        %395 = sbr.rel (%p393) target = $region56
      $region55: #{tpu_custom_call.1} parent=5 // pred_region
        %s396 = ssub.s32 %s14, 2
        // Predicated region
        $region57: #{tpu_custom_call.1} parent=55 // pred_check
          %p397 = pneg %p180
        $region58: #{tpu_custom_call.1} parent=55 // pred_check_branch
          %399 = sbr.rel (%p397) target = $region60
        $region59: #{tpu_custom_call.1} parent=55 // pred_region
          %s400 = sand.u32 %s165, 1
          %s401 = scalar_lea.sflag [#allocation4], %s400
          %s402 = sand.u32 %s165, 1
          %s403 = smul.addr %s402, 8
          %s404 = scalar_lea.vmem [#allocation3], %s403
          %406 = dma.done %s401, 128
        $region60: #{tpu_custom_call.1} parent=55 // pred_fallthru
          _
      $region56: #{tpu_custom_call.1} parent=5 // pred_fallthru
        _
    $region6: #{tpu_custom_call.1} parent=1 // loop_footer
      %s18 = sadd.s32 1, %s14
    $region7: #{tpu_custom_call.1} parent=1 // loop_footer_branch
      %13 = sbr.rel target = $region3
    $region8: #{tpu_custom_call.1} parent=1 // loop_exit
      _
    %407 = vsyncpa [#allocation4], 1
    %s408 = scalar_lea.sflag [#allocation4], 1
    %409 = vsyncpa %s408, 1

</llo_original>
